<compile_context>
chip_gen: v7x
topology: tpu7x:2x2x1
jax: 0.10.0
libtpu: 0.0.40
codegen_flags: <defaults>
</compile_context>

<pallas_src>
import functools

import jax
import jax.numpy as jnp
from jax.experimental import pallas as pl
from jax.experimental.pallas import tpu as pltpu


def _round_up(n, m):
    return ((n + m - 1) // m) * m


def _mlp_kernel(x_ref, w1_ref, b1_ref, w2_ref, b2_ref, out_ref, *,
                mxu_dtype, tile_rows, num_features, out_cols,
                packed_in, packed_out):
    # x may arrive lane-packed as (tile_rows*F/128, 128); restore (tile_rows, F).
    x = x_ref[...]
    if packed_in:
        x = x.reshape(tile_rows, num_features)

    # Hidden layer: (tn, F) @ (F, D) + (1, D), ReLU.  MXU operands in mxu_dtype
    # (no-op cast when x already arrives in that dtype), f32 accumulation; all
    # elementwise work stays f32 (safe on v5e's f32-only VPU/EUP).
    h = jnp.dot(x.astype(mxu_dtype), w1_ref[...],
                preferred_element_type=jnp.float32)
    h = jnp.maximum(h + b1_ref[...], 0.0)

    # Output layer: (tn, D) @ (D, C) + (1, C).
    z = jnp.dot(h.astype(mxu_dtype), w2_ref[...],
                preferred_element_type=jnp.float32)
    z = z + b2_ref[...]

    # Numerically stable log_softmax over the class axis.
    m = jnp.max(z, axis=-1, keepdims=True)
    s = z - m
    lse = jnp.log(jnp.sum(jnp.exp(s), axis=-1, keepdims=True))
    logp = s - lse

    # Single merged slab [log_probs | logits]; store lane-dense (rows of 128)
    # so the writeback is full-width vst + dense DMA instead of 8-lane vst.msk.
    slab = jnp.concatenate([logp, z], axis=-1).astype(out_ref.dtype)
    if packed_out:
        slab = slab.reshape(tile_rows * out_cols // 128, 128)
    out_ref[...] = slab


def mlp_forward(x, w1, b1, w2, b2, *, tile_n=4096, mxu_dtype=jnp.bfloat16,
                input_buffers=None):
    """Fused MLP forward. Returns (log_softmax(logits, dim=1), logits)."""
    N, F = x.shape
    D = w1.shape[1]
    C = w2.shape[1]
    out_cols = 2 * C

    # ---- Row-tile selection --------------------------------------------------
    # Small problems: a single grid step (no tiling for its own sake).
    # Large problems: 128-row-multiple tiles (keeps packed blocks (8,128)-aligned)
    # and an even number of steps so v7x's two TensorCores both engage.
    n16 = _round_up(N, 16)
    cap = max(128, _round_up(tile_n, 128))
    if n16 <= cap:
        tn = n16
    else:
        steps = -(-n16 // cap)
        steps += steps % 2                      # keep the grid even for v7x
        tn = _round_up(-(-n16 // steps), 128)
    n_pad = _round_up(N, tn)
    grid_steps = n_pad // tn

    if n_pad != N:
        x = jnp.pad(x, ((0, n_pad - N), (0, 0)))   # padded rows sliced off below

    # Lane-dense relayout eligibility (row-major byte reinterpretation is free).
    single = grid_steps == 1
    can_pack_in = (tn * F) % 128 == 0 and (single or (tn * F // 128) % 8 == 0)
    can_pack_out = (tn * out_cols) % 128 == 0 and (single or (tn * out_cols // 128) % 8 == 0)

    # Params: weights in MXU dtype, biases as f32 broadcast rows; all VMEM-resident.
    w1c = w1.astype(mxu_dtype)
    w2c = w2.astype(mxu_dtype)
    b1r = b1.reshape(1, D).astype(jnp.float32)
    b2r = b2.reshape(1, C).astype(jnp.float32)

    def run(pack_in, pack_out):
        if pack_in:
            x_in = x.reshape(n_pad * F // 128, 128)      # free, contiguous
            x_block = (tn * F // 128, 128)
        else:
            x_in = x
            x_block = (tn, F)

        if input_buffers is not None and grid_steps > 1:
            # Optional deeper pipelining of the streamed x tiles (params default).
            x_spec = pl.BlockSpec(x_block, lambda i: (i, 0),
                                  pipeline_mode=pl.Buffered(input_buffers))
        else:
            x_spec = pl.BlockSpec(x_block, lambda i: (i, 0))

        if pack_out:
            out_struct = jax.ShapeDtypeStruct((n_pad * out_cols // 128, 128),
                                              jnp.float32)
            out_spec = pl.BlockSpec((tn * out_cols // 128, 128), lambda i: (i, 0))
        else:
            out_struct = jax.ShapeDtypeStruct((n_pad, out_cols), jnp.float32)
            out_spec = pl.BlockSpec((tn, out_cols), lambda i: (i, 0))

        grid_spec = pl.GridSpec(
            grid=(grid_steps,),
            in_specs=[
                x_spec,                                    # x: row-tiled, pipelined
                pl.BlockSpec((F, D), lambda i: (0, 0)),    # w1: VMEM-resident
                pl.BlockSpec((1, D), lambda i: (0, 0)),    # b1: VMEM-resident
                pl.BlockSpec((D, C), lambda i: (0, 0)),    # w2: VMEM-resident
                pl.BlockSpec((1, C), lambda i: (0, 0)),    # b2: VMEM-resident
            ],
            out_specs=out_spec,
        )

        # VMEM budget from the actual tile footprint; cap well under v7x's 64 MiB.
        w_isz = jnp.dtype(mxu_dtype).itemsize
        nbuf = max(2, input_buffers or 2)
        vmem_need = (nbuf * tn * F * x.dtype.itemsize          # x tiles
                     + 2 * tn * out_cols * 4                   # output tiles
                     + 2 * ((F * D + D * C) * w_isz + (D + C) * 4))  # params
        vmem_limit = int(min(48 * 1024 * 1024,
                             max(4 * 1024 * 1024, 2 * vmem_need)))

        # Advisory cost: this kernel is firmly HBM-bound (~7 flops/byte).
        cost = pl.CostEstimate(
            flops=2 * n_pad * (F * D + D * C) + 6 * n_pad * C,
            transcendentals=n_pad * (C + 1),
            bytes_accessed=(n_pad * F * x.dtype.itemsize + n_pad * out_cols * 4
                            + (F * D + D * C) * w_isz + (D + C) * 4),
        )

        kernel = functools.partial(
            _mlp_kernel, mxu_dtype=mxu_dtype, tile_rows=tn, num_features=F,
            out_cols=out_cols, packed_in=pack_in, packed_out=pack_out)

        out = pl.pallas_call(
            kernel,
            out_shape=out_struct,
            grid_spec=grid_spec,
            compiler_params=pltpu.CompilerParams(
                dimension_semantics=("parallel",),   # rows independent -> megacore
                vmem_limit_bytes=vmem_limit,
            ),
            cost_estimate=cost,
        )(x_in, w1c, b1r, w2c, b2r)

        out = out.reshape(n_pad, out_cols)            # free for the packed layout
        return out[:N, :C], out[:N, C:]               # (log_probs, logits)

    # Prefer the lane-dense layouts; fall back to the unpacked (known-good) layout
    # if the running Mosaic build cannot lower the in-kernel relayout reshapes.
    attempts = []
    for cfg in ((can_pack_in, can_pack_out), (False, can_pack_out), (False, False)):
        if cfg not in attempts:
            attempts.append(cfg)
    last_err = None
    for pack_in, pack_out in attempts:
        try:
            return run(pack_in, pack_out)
        except Exception as e:   # lowering fallback only; correctness checked in main
            last_err = e
    raise last_err


def init_params(key, num_features, num_classes, dims=16):
    """Deterministic init mimicking torch.nn.Linear (uniform +/- 1/sqrt(fan_in))."""
    k1, k2, k3, k4 = jax.random.split(key, 4)
    bound1 = 1.0 / jnp.sqrt(num_features)
    bound2 = 1.0 / jnp.sqrt(dims)
    w1 = jax.random.uniform(k1, (num_features, dims), jnp.float32, -bound1, bound1)
    b1 = jax.random.uniform(k2, (dims,), jnp.float32, -bound1, bound1)
    w2 = jax.random.uniform(k3, (dims, num_classes), jnp.float32, -bound2, bound2)
    b2 = jax.random.uniform(k4, (num_classes,), jnp.float32, -bound2, bound2)
    return w1, b1, w2, b2


if __name__ == "__main__":
    num_nodes = 200
    num_features = 32
    num_classes = 4
    dims = 16

    key = jax.random.PRNGKey(0)
    kx, kp = jax.random.split(key)
    x = jax.random.normal(kx, (num_nodes, num_features), jnp.float32)
    # edge_index is unused by the forward pass, exactly as in the PyTorch module.
    edge_index = jnp.zeros((2, 16), jnp.int32)

    w1, b1, w2, b2 = init_params(kp, num_features, num_classes, dims)

    # Pure-JAX reference.
    h_ref = jnp.maximum(x @ w1 + b1, 0.0)
    z_ref = h_ref @ w2 + b2
    lp_ref = jax.nn.log_softmax(z_ref, axis=1)

    # 1) Default path: bf16 MXU operands, f32 accum/epilogue, single grid step
    #    (N=200 -> tn=208), lane-dense packed input/output slabs.
    log_probs, logits = mlp_forward(x, w1, b1, w2, b2)
    jax.block_until_ready((log_probs, logits))
    assert logits.shape == (num_nodes, num_classes)
    assert log_probs.shape == (num_nodes, num_classes)
    assert jnp.allclose(logits, z_ref, atol=5e-2), "bf16 logits drifted too far"
    assert jnp.allclose(log_probs, lp_ref, atol=5e-2), "bf16 log_softmax drifted"
    assert jnp.allclose(log_probs, jax.nn.log_softmax(logits, axis=1),
                        atol=1e-5), "log_probs/logits inconsistent"

    # 2) Exact-f32 path for tight numerical parity with the PyTorch module.
    lp32, z32 = mlp_forward(x, w1, b1, w2, b2, mxu_dtype=jnp.float32)
    jax.block_until_ready((lp32, z32))
    assert jnp.allclose(z32, z_ref, atol=1e-5), "f32 logits mismatch"
    assert jnp.allclose(lp32, lp_ref, atol=1e-5), "f32 log_softmax mismatch"

    # 3) Multi-step grid (tile_n=128 -> 2 even steps, padded tail) exercising the
    #    row-tiled pipeline + padding; f32 for tight parity.
    lp_mt, z_mt = mlp_forward(x, w1, b1, w2, b2, tile_n=128, mxu_dtype=jnp.float32)
    jax.block_until_ready((lp_mt, z_mt))
    assert jnp.allclose(z_mt, z_ref, atol=1e-5), "multi-step logits mismatch"
    assert jnp.allclose(lp_mt, lp_ref, atol=1e-5), "multi-step log_softmax mismatch"

    # 4) Caller-provided bf16 x is accepted as-is (no wrapper cast; halves the
    #    dominant HBM stream). Looser tolerance covers the extra input rounding.
    lp_b16, z_b16 = mlp_forward(x.astype(jnp.bfloat16), w1, b1, w2, b2)
    jax.block_until_ready((lp_b16, z_b16))
    assert jnp.allclose(z_b16, z_ref, atol=1.5e-1), "bf16-input logits drifted"
    assert jnp.allclose(lp_b16, lp_ref, atol=1.5e-1), "bf16-input log_softmax drifted"
    assert jnp.allclose(lp_b16, jax.nn.log_softmax(z_b16, axis=1),
                        atol=1e-5), "bf16-input log_probs/logits inconsistent"

    print("KERNEL_OK")
</pallas_src>

<mosaic_0001>
module attributes {stable_mosaic.version = 11 : i64} {
  func.func @_mlp_kernel(%arg0: i32, %arg1: memref<52x128xf32, #tpu.memory_space<vmem>>, %arg2: memref<32x16xbf16, #tpu.memory_space<vmem>>, %arg3: memref<1x16xf32, #tpu.memory_space<vmem>>, %arg4: memref<16x4xbf16, #tpu.memory_space<vmem>>, %arg5: memref<1x4xf32, #tpu.memory_space<vmem>>, %arg6: memref<13x128xf32, #tpu.memory_space<vmem>>) attributes {dimension_semantics = [#tpu.dimension_semantics<parallel>], iteration_bounds = array<i64: 1>, scalar_prefetch = 0 : i64, scratch_operands = 0 : i64, tpu.core_type = #tpu.core_type<tc>, window_params = [{transform_indices = @transform_0, window_bounds = array<i64: 52, 128>}, {pipeline_mode = #tpu.pipeline_mode<synchronous>, transform_indices = @transform_1, window_bounds = array<i64: 32, 16>}, {pipeline_mode = #tpu.pipeline_mode<synchronous>, transform_indices = @transform_2, window_bounds = array<i64: 1, 16>}, {pipeline_mode = #tpu.pipeline_mode<synchronous>, transform_indices = @transform_3, window_bounds = array<i64: 16, 4>}, {pipeline_mode = #tpu.pipeline_mode<synchronous>, transform_indices = @transform_4, window_bounds = array<i64: 1, 4>}, {transform_indices = @transform_5, window_bounds = array<i64: 13, 128>}]} {
    %c0 = arith.constant 0 : index
    %c0_0 = arith.constant 0 : index
    %0 = vector.load %arg1[%c0, %c0_0] : memref<52x128xf32, #tpu.memory_space<vmem>>, vector<52x128xf32>
    %1 = vector.shape_cast %0 : vector<52x128xf32> to vector<208x32xf32>
    %2 = arith.truncf %1 : vector<208x32xf32> to vector<208x32xbf16>
    %c0_1 = arith.constant 0 : index
    %c0_2 = arith.constant 0 : index
    %3 = vector.load %arg2[%c0_1, %c0_2] : memref<32x16xbf16, #tpu.memory_space<vmem>>, vector<32x16xbf16>
    %cst = arith.constant dense<0.000000e+00> : vector<208x16xf32>
    %4 = tpu.matmul %2, %3, %cst {dimension_numbers = #tpu.dot_dimension_numbers<[1], [0], [0], [1], [0, 0, 1, 1], [], []>} : vector<208x32xbf16>, vector<32x16xbf16>, vector<208x16xf32> -> vector<208x16xf32>
    %c0_3 = arith.constant 0 : index
    %c0_4 = arith.constant 0 : index
    %5 = vector.load %arg3[%c0_3, %c0_4] : memref<1x16xf32, #tpu.memory_space<vmem>>, vector<1x16xf32>
    %6 = vector.broadcast %5 : vector<1x16xf32> to vector<208x16xf32>
    %7 = arith.addf %4, %6 : vector<208x16xf32>
    %cst_5 = arith.constant 0.000000e+00 : f32
    %8 = vector.broadcast %cst_5 : f32 to vector<208x16xf32>
    %9 = arith.maximumf %7, %8 : vector<208x16xf32>
    %10 = arith.truncf %9 : vector<208x16xf32> to vector<208x16xbf16>
    %c0_6 = arith.constant 0 : index
    %c0_7 = arith.constant 0 : index
    %11 = vector.load %arg4[%c0_6, %c0_7] : memref<16x4xbf16, #tpu.memory_space<vmem>>, vector<16x4xbf16>
    %cst_8 = arith.constant dense<0.000000e+00> : vector<208x4xf32>
    %12 = tpu.matmul %10, %11, %cst_8 {dimension_numbers = #tpu.dot_dimension_numbers<[1], [0], [0], [1], [0, 0, 1, 1], [], []>} : vector<208x16xbf16>, vector<16x4xbf16>, vector<208x4xf32> -> vector<208x4xf32>
    %c0_9 = arith.constant 0 : index
    %c0_10 = arith.constant 0 : index
    %13 = vector.load %arg5[%c0_9, %c0_10] : memref<1x4xf32, #tpu.memory_space<vmem>>, vector<1x4xf32>
    %14 = vector.broadcast %13 : vector<1x4xf32> to vector<208x4xf32>
    %15 = arith.addf %12, %14 : vector<208x4xf32>
    %cst_11 = arith.constant dense<0xFF800000> : vector<208xf32>
    %16 = vector.multi_reduction <maximumf>, %15, %cst_11 [1] : vector<208x4xf32> to vector<208xf32>
    %17 = vector.shape_cast %16 : vector<208xf32> to vector<208x1xf32>
    %18 = vector.broadcast %17 : vector<208x1xf32> to vector<208x4xf32>
    %19 = arith.subf %15, %18 : vector<208x4xf32>
    %20 = math.exp %19 : vector<208x4xf32>
    %cst_12 = arith.constant dense<0.000000e+00> : vector<208xf32>
    %21 = vector.multi_reduction <add>, %20, %cst_12 [1] : vector<208x4xf32> to vector<208xf32>
    %22 = vector.shape_cast %21 : vector<208xf32> to vector<208x1xf32>
    %23 = math.log %22 : vector<208x1xf32>
    %24 = vector.broadcast %23 : vector<208x1xf32> to vector<208x4xf32>
    %25 = arith.subf %19, %24 : vector<208x4xf32>
    %26 = tpu.concatenate %25, %15 in 1 : vector<208x4xf32>, vector<208x4xf32> -> vector<208x8xf32>
    %27 = vector.shape_cast %26 : vector<208x8xf32> to vector<13x128xf32>
    %c0_13 = arith.constant 0 : index
    %c0_14 = arith.constant 0 : index
    %28 = vector.load %arg6[%c0_13, %c0_14] : memref<13x128xf32, #tpu.memory_space<vmem>>, vector<13x128xf32>
    tpu.vector_store %arg6[%c0_13, %c0_14], %27 {strides = array<i32>} : memref<13x128xf32, #tpu.memory_space<vmem>>, vector<13x128xf32>,
    return
  }
  func.func @transform_0(%arg0: i32) -> (i32, i32) {
    %c0_i32 = arith.constant 0 : i32
    %c0_i32_0 = arith.constant 0 : i32
    return %arg0, %c0_i32 : i32, i32
  }
  func.func @transform_1(%arg0: i32) -> (i32, i32) {
    %c0_i32 = arith.constant 0 : i32
    %c0_i32_0 = arith.constant 0 : i32
    %c0_i32_1 = arith.constant 0 : i32
    return %c0_i32, %c0_i32_0 : i32, i32
  }
  func.func @transform_2(%arg0: i32) -> (i32, i32) {
    %c0_i32 = arith.constant 0 : i32
    %c0_i32_0 = arith.constant 0 : i32
    %c0_i32_1 = arith.constant 0 : i32
    return %c0_i32, %c0_i32_0 : i32, i32
  }
  func.func @transform_3(%arg0: i32) -> (i32, i32) {
    %c0_i32 = arith.constant 0 : i32
    %c0_i32_0 = arith.constant 0 : i32
    %c0_i32_1 = arith.constant 0 : i32
    return %c0_i32, %c0_i32_0 : i32, i32
  }
  func.func @transform_4(%arg0: i32) -> (i32, i32) {
    %c0_i32 = arith.constant 0 : i32
    %c0_i32_0 = arith.constant 0 : i32
    %c0_i32_1 = arith.constant 0 : i32
    return %c0_i32, %c0_i32_0 : i32, i32
  }
  func.func @transform_5(%arg0: i32) -> (i32, i32) {
    %c0_i32 = arith.constant 0 : i32
    %c0_i32_0 = arith.constant 0 : i32
    return %arg0, %c0_i32 : i32, i32
  }
}

module attributes {stable_mosaic.version = 11 : i64} {
  func.func @_mlp_kernel(%arg0: i32, %arg1: memref<208x32xf32, #tpu.memory_space<vmem>>, %arg2: memref<32x16xbf16, #tpu.memory_space<vmem>>, %arg3: memref<1x16xf32, #tpu.memory_space<vmem>>, %arg4: memref<16x4xbf16, #tpu.memory_space<vmem>>, %arg5: memref<1x4xf32, #tpu.memory_space<vmem>>, %arg6: memref<13x128xf32, #tpu.memory_space<vmem>>) attributes {dimension_semantics = [#tpu.dimension_semantics<parallel>], iteration_bounds = array<i64: 1>, scalar_prefetch = 0 : i64, scratch_operands = 0 : i64, tpu.core_type = #tpu.core_type<tc>, window_params = [{transform_indices = @transform_0, window_bounds = array<i64: 208, 32>}, {pipeline_mode = #tpu.pipeline_mode<synchronous>, transform_indices = @transform_1, window_bounds = array<i64: 32, 16>}, {pipeline_mode = #tpu.pipeline_mode<synchronous>, transform_indices = @transform_2, window_bounds = array<i64: 1, 16>}, {pipeline_mode = #tpu.pipeline_mode<synchronous>, transform_indices = @transform_3, window_bounds = array<i64: 16, 4>}, {pipeline_mode = #tpu.pipeline_mode<synchronous>, transform_indices = @transform_4, window_bounds = array<i64: 1, 4>}, {transform_indices = @transform_5, window_bounds = array<i64: 13, 128>}]} {
    %c0 = arith.constant 0 : index
    %c0_0 = arith.constant 0 : index
    %0 = vector.load %arg1[%c0, %c0_0] : memref<208x32xf32, #tpu.memory_space<vmem>>, vector<208x32xf32>
    %1 = arith.truncf %0 : vector<208x32xf32> to vector<208x32xbf16>
    %c0_1 = arith.constant 0 : index
    %c0_2 = arith.constant 0 : index
    %2 = vector.load %arg2[%c0_1, %c0_2] : memref<32x16xbf16, #tpu.memory_space<vmem>>, vector<32x16xbf16>
    %cst = arith.constant dense<0.000000e+00> : vector<208x16xf32>
    %3 = tpu.matmul %1, %2, %cst {dimension_numbers = #tpu.dot_dimension_numbers<[1], [0], [0], [1], [0, 0, 1, 1], [], []>} : vector<208x32xbf16>, vector<32x16xbf16>, vector<208x16xf32> -> vector<208x16xf32>
    %c0_3 = arith.constant 0 : index
    %c0_4 = arith.constant 0 : index
    %4 = vector.load %arg3[%c0_3, %c0_4] : memref<1x16xf32, #tpu.memory_space<vmem>>, vector<1x16xf32>
    %5 = vector.broadcast %4 : vector<1x16xf32> to vector<208x16xf32>
    %6 = arith.addf %3, %5 : vector<208x16xf32>
    %cst_5 = arith.constant 0.000000e+00 : f32
    %7 = vector.broadcast %cst_5 : f32 to vector<208x16xf32>
    %8 = arith.maximumf %6, %7 : vector<208x16xf32>
    %9 = arith.truncf %8 : vector<208x16xf32> to vector<208x16xbf16>
    %c0_6 = arith.constant 0 : index
    %c0_7 = arith.constant 0 : index
    %10 = vector.load %arg4[%c0_6, %c0_7] : memref<16x4xbf16, #tpu.memory_space<vmem>>, vector<16x4xbf16>
    %cst_8 = arith.constant dense<0.000000e+00> : vector<208x4xf32>
    %11 = tpu.matmul %9, %10, %cst_8 {dimension_numbers = #tpu.dot_dimension_numbers<[1], [0], [0], [1], [0, 0, 1, 1], [], []>} : vector<208x16xbf16>, vector<16x4xbf16>, vector<208x4xf32> -> vector<208x4xf32>
    %c0_9 = arith.constant 0 : index
    %c0_10 = arith.constant 0 : index
    %12 = vector.load %arg5[%c0_9, %c0_10] : memref<1x4xf32, #tpu.memory_space<vmem>>, vector<1x4xf32>
    %13 = vector.broadcast %12 : vector<1x4xf32> to vector<208x4xf32>
    %14 = arith.addf %11, %13 : vector<208x4xf32>
    %cst_11 = arith.constant dense<0xFF800000> : vector<208xf32>
    %15 = vector.multi_reduction <maximumf>, %14, %cst_11 [1] : vector<208x4xf32> to vector<208xf32>
    %16 = vector.shape_cast %15 : vector<208xf32> to vector<208x1xf32>
    %17 = vector.broadcast %16 : vector<208x1xf32> to vector<208x4xf32>
    %18 = arith.subf %14, %17 : vector<208x4xf32>
    %19 = math.exp %18 : vector<208x4xf32>
    %cst_12 = arith.constant dense<0.000000e+00> : vector<208xf32>
    %20 = vector.multi_reduction <add>, %19, %cst_12 [1] : vector<208x4xf32> to vector<208xf32>
    %21 = vector.shape_cast %20 : vector<208xf32> to vector<208x1xf32>
    %22 = math.log %21 : vector<208x1xf32>
    %23 = vector.broadcast %22 : vector<208x1xf32> to vector<208x4xf32>
    %24 = arith.subf %18, %23 : vector<208x4xf32>
    %25 = tpu.concatenate %24, %14 in 1 : vector<208x4xf32>, vector<208x4xf32> -> vector<208x8xf32>
    %26 = vector.shape_cast %25 : vector<208x8xf32> to vector<13x128xf32>
    %c0_13 = arith.constant 0 : index
    %c0_14 = arith.constant 0 : index
    %27 = vector.load %arg6[%c0_13, %c0_14] : memref<13x128xf32, #tpu.memory_space<vmem>>, vector<13x128xf32>
    tpu.vector_store %arg6[%c0_13, %c0_14], %26 {strides = array<i32>} : memref<13x128xf32, #tpu.memory_space<vmem>>, vector<13x128xf32>,
    return
  }
  func.func @transform_0(%arg0: i32) -> (i32, i32) {
    %c0_i32 = arith.constant 0 : i32
    %c0_i32_0 = arith.constant 0 : i32
    return %arg0, %c0_i32 : i32, i32
  }
  func.func @transform_1(%arg0: i32) -> (i32, i32) {
    %c0_i32 = arith.constant 0 : i32
    %c0_i32_0 = arith.constant 0 : i32
    %c0_i32_1 = arith.constant 0 : i32
    return %c0_i32, %c0_i32_0 : i32, i32
  }
  func.func @transform_2(%arg0: i32) -> (i32, i32) {
    %c0_i32 = arith.constant 0 : i32
    %c0_i32_0 = arith.constant 0 : i32
    %c0_i32_1 = arith.constant 0 : i32
    return %c0_i32, %c0_i32_0 : i32, i32
  }
  func.func @transform_3(%arg0: i32) -> (i32, i32) {
    %c0_i32 = arith.constant 0 : i32
    %c0_i32_0 = arith.constant 0 : i32
    %c0_i32_1 = arith.constant 0 : i32
    return %c0_i32, %c0_i32_0 : i32, i32
  }
  func.func @transform_4(%arg0: i32) -> (i32, i32) {
    %c0_i32 = arith.constant 0 : i32
    %c0_i32_0 = arith.constant 0 : i32
    %c0_i32_1 = arith.constant 0 : i32
    return %c0_i32, %c0_i32_0 : i32, i32
  }
  func.func @transform_5(%arg0: i32) -> (i32, i32) {
    %c0_i32 = arith.constant 0 : i32
    %c0_i32_0 = arith.constant 0 : i32
    return %arg0, %c0_i32 : i32, i32
  }
}

module attributes {stable_mosaic.version = 11 : i64} {
  func.func @_mlp_kernel(%arg0: i32, %arg1: memref<208x32xf32, #tpu.memory_space<vmem>>, %arg2: memref<32x16xbf16, #tpu.memory_space<vmem>>, %arg3: memref<1x16xf32, #tpu.memory_space<vmem>>, %arg4: memref<16x4xbf16, #tpu.memory_space<vmem>>, %arg5: memref<1x4xf32, #tpu.memory_space<vmem>>, %arg6: memref<208x8xf32, #tpu.memory_space<vmem>>) attributes {dimension_semantics = [#tpu.dimension_semantics<parallel>], iteration_bounds = array<i64: 1>, scalar_prefetch = 0 : i64, scratch_operands = 0 : i64, tpu.core_type = #tpu.core_type<tc>, window_params = [{transform_indices = @transform_0, window_bounds = array<i64: 208, 32>}, {pipeline_mode = #tpu.pipeline_mode<synchronous>, transform_indices = @transform_1, window_bounds = array<i64: 32, 16>}, {pipeline_mode = #tpu.pipeline_mode<synchronous>, transform_indices = @transform_2, window_bounds = array<i64: 1, 16>}, {pipeline_mode = #tpu.pipeline_mode<synchronous>, transform_indices = @transform_3, window_bounds = array<i64: 16, 4>}, {pipeline_mode = #tpu.pipeline_mode<synchronous>, transform_indices = @transform_4, window_bounds = array<i64: 1, 4>}, {transform_indices = @transform_5, window_bounds = array<i64: 208, 8>}]} {
    %c0 = arith.constant 0 : index
    %c0_0 = arith.constant 0 : index
    %0 = vector.load %arg1[%c0, %c0_0] : memref<208x32xf32, #tpu.memory_space<vmem>>, vector<208x32xf32>
    %1 = arith.truncf %0 : vector<208x32xf32> to vector<208x32xbf16>
    %c0_1 = arith.constant 0 : index
    %c0_2 = arith.constant 0 : index
    %2 = vector.load %arg2[%c0_1, %c0_2] : memref<32x16xbf16, #tpu.memory_space<vmem>>, vector<32x16xbf16>
    %cst = arith.constant dense<0.000000e+00> : vector<208x16xf32>
    %3 = tpu.matmul %1, %2, %cst {dimension_numbers = #tpu.dot_dimension_numbers<[1], [0], [0], [1], [0, 0, 1, 1], [], []>} : vector<208x32xbf16>, vector<32x16xbf16>, vector<208x16xf32> -> vector<208x16xf32>
    %c0_3 = arith.constant 0 : index
    %c0_4 = arith.constant 0 : index
    %4 = vector.load %arg3[%c0_3, %c0_4] : memref<1x16xf32, #tpu.memory_space<vmem>>, vector<1x16xf32>
    %5 = vector.broadcast %4 : vector<1x16xf32> to vector<208x16xf32>
    %6 = arith.addf %3, %5 : vector<208x16xf32>
    %cst_5 = arith.constant 0.000000e+00 : f32
    %7 = vector.broadcast %cst_5 : f32 to vector<208x16xf32>
    %8 = arith.maximumf %6, %7 : vector<208x16xf32>
    %9 = arith.truncf %8 : vector<208x16xf32> to vector<208x16xbf16>
    %c0_6 = arith.constant 0 : index
    %c0_7 = arith.constant 0 : index
    %10 = vector.load %arg4[%c0_6, %c0_7] : memref<16x4xbf16, #tpu.memory_space<vmem>>, vector<16x4xbf16>
    %cst_8 = arith.constant dense<0.000000e+00> : vector<208x4xf32>
    %11 = tpu.matmul %9, %10, %cst_8 {dimension_numbers = #tpu.dot_dimension_numbers<[1], [0], [0], [1], [0, 0, 1, 1], [], []>} : vector<208x16xbf16>, vector<16x4xbf16>, vector<208x4xf32> -> vector<208x4xf32>
    %c0_9 = arith.constant 0 : index
    %c0_10 = arith.constant 0 : index
    %12 = vector.load %arg5[%c0_9, %c0_10] : memref<1x4xf32, #tpu.memory_space<vmem>>, vector<1x4xf32>
    %13 = vector.broadcast %12 : vector<1x4xf32> to vector<208x4xf32>
    %14 = arith.addf %11, %13 : vector<208x4xf32>
    %cst_11 = arith.constant dense<0xFF800000> : vector<208xf32>
    %15 = vector.multi_reduction <maximumf>, %14, %cst_11 [1] : vector<208x4xf32> to vector<208xf32>
    %16 = vector.shape_cast %15 : vector<208xf32> to vector<208x1xf32>
    %17 = vector.broadcast %16 : vector<208x1xf32> to vector<208x4xf32>
    %18 = arith.subf %14, %17 : vector<208x4xf32>
    %19 = math.exp %18 : vector<208x4xf32>
    %cst_12 = arith.constant dense<0.000000e+00> : vector<208xf32>
    %20 = vector.multi_reduction <add>, %19, %cst_12 [1] : vector<208x4xf32> to vector<208xf32>
    %21 = vector.shape_cast %20 : vector<208xf32> to vector<208x1xf32>
    %22 = math.log %21 : vector<208x1xf32>
    %23 = vector.broadcast %22 : vector<208x1xf32> to vector<208x4xf32>
    %24 = arith.subf %18, %23 : vector<208x4xf32>
    %25 = tpu.concatenate %24, %14 in 1 : vector<208x4xf32>, vector<208x4xf32> -> vector<208x8xf32>
    %c0_13 = arith.constant 0 : index
    %c0_14 = arith.constant 0 : index
    %26 = vector.load %arg6[%c0_13, %c0_14] : memref<208x8xf32, #tpu.memory_space<vmem>>, vector<208x8xf32>
    tpu.vector_store %arg6[%c0_13, %c0_14], %25 {strides = array<i32>} : memref<208x8xf32, #tpu.memory_space<vmem>>, vector<208x8xf32>,
    return
  }
  func.func @transform_0(%arg0: i32) -> (i32, i32) {
    %c0_i32 = arith.constant 0 : i32
    %c0_i32_0 = arith.constant 0 : i32
    return %arg0, %c0_i32 : i32, i32
  }
  func.func @transform_1(%arg0: i32) -> (i32, i32) {
    %c0_i32 = arith.constant 0 : i32
    %c0_i32_0 = arith.constant 0 : i32
    %c0_i32_1 = arith.constant 0 : i32
    return %c0_i32, %c0_i32_0 : i32, i32
  }
  func.func @transform_2(%arg0: i32) -> (i32, i32) {
    %c0_i32 = arith.constant 0 : i32
    %c0_i32_0 = arith.constant 0 : i32
    %c0_i32_1 = arith.constant 0 : i32
    return %c0_i32, %c0_i32_0 : i32, i32
  }
  func.func @transform_3(%arg0: i32) -> (i32, i32) {
    %c0_i32 = arith.constant 0 : i32
    %c0_i32_0 = arith.constant 0 : i32
    %c0_i32_1 = arith.constant 0 : i32
    return %c0_i32, %c0_i32_0 : i32, i32
  }
  func.func @transform_4(%arg0: i32) -> (i32, i32) {
    %c0_i32 = arith.constant 0 : i32
    %c0_i32_0 = arith.constant 0 : i32
    %c0_i32_1 = arith.constant 0 : i32
    return %c0_i32, %c0_i32_0 : i32, i32
  }
  func.func @transform_5(%arg0: i32) -> (i32, i32) {
    %c0_i32 = arith.constant 0 : i32
    %c0_i32_0 = arith.constant 0 : i32
    return %arg0, %c0_i32 : i32, i32
  }
}

</mosaic_0001>

<llo_original>
// kernel: tpu_custom_call.1
$region0: #{tpu_custom_call.1}
  #allocation0 [shape = 'u32[]', space=smem, size = 0x4, offset = 0x4, fixed_abs, tag = 'smem constant byte address 0x4 - core index']
  #allocation1 [shape = 'u32[144,128]{1,0:T(1,128)}', space=vmem, size = 0x12000, scoped, tag = 'internal scratch']
  %s0 = inlined_call_operand.vmem [shape: f32[208,32], index: 0, kind: input, shape index: {}]
  %s1 = inlined_call_operand.vmem [shape: bf16[32,16], index: 1, kind: input, shape index: {}]
  %s2 = inlined_call_operand.vmem [shape: f32[1,16], index: 2, kind: input, shape index: {}]
  %s3 = inlined_call_operand.vmem [shape: bf16[16,4], index: 3, kind: input, shape index: {}]
  %s4 = inlined_call_operand.vmem [shape: f32[1,4], index: 4, kind: input, shape index: {}]
  %s5 = inlined_call_operand.vmem [shape: f32[208,8], index: 5, kind: output, shape index: {}]
  %s6 = sld [smem:[#allocation0]]
  $region30: #{tpu_custom_call.1} parent=0
    _
  %s8 = ssub.s32 1, %s6
  %s9 = scalar_select 0, %s8, %s6
  // Predicated region
  $region2: #{tpu_custom_call.1} parent=0 // pred_check
    _
  $region3: #{tpu_custom_call.1} parent=0 // pred_check_branch
    %11 = sbr.rel (0) target = $region5
  $region4: #{tpu_custom_call.1} parent=0 // pred_region
    _
  $region5: #{tpu_custom_call.1} parent=0 // pred_fallthru
    _
  // Predicated region
  $region6: #{tpu_custom_call.1} parent=0 // pred_check
    _
  $region7: #{tpu_custom_call.1} parent=0 // pred_check_branch
    %13 = sbr.rel (0) target = $region9
  $region8: #{tpu_custom_call.1} parent=0 // pred_region
    _
  $region9: #{tpu_custom_call.1} parent=0 // pred_fallthru
    _
  // Predicated region
  $region10: #{tpu_custom_call.1} parent=0 // pred_check
    _
  $region11: #{tpu_custom_call.1} parent=0 // pred_check_branch
    %15 = sbr.rel (0) target = $region13
  $region12: #{tpu_custom_call.1} parent=0 // pred_region
    _
  $region13: #{tpu_custom_call.1} parent=0 // pred_fallthru
    _
  // Predicated region
  $region14: #{tpu_custom_call.1} parent=0 // pred_check
    _
  $region15: #{tpu_custom_call.1} parent=0 // pred_check_branch
    %17 = sbr.rel (0) target = $region17
  $region16: #{tpu_custom_call.1} parent=0 // pred_region
    _
  $region17: #{tpu_custom_call.1} parent=0 // pred_fallthru
    _
  // Predicated region
  $region18: #{tpu_custom_call.1} parent=0 // pred_check
    _
  $region19: #{tpu_custom_call.1} parent=0 // pred_check_branch
    %19 = sbr.rel (0) target = $region21
  $region20: #{tpu_custom_call.1} parent=0 // pred_region
    _
  $region21: #{tpu_custom_call.1} parent=0 // pred_fallthru
    _
  %v21 = vld [vmem:[%s0] sm:$0xff]
  %v22 = vld [vmem:[%s0 + $0x8] sm:$0xff]
  %v23 = vld [vmem:[%s0 + $0x10] sm:$0xff]
  %v24 = vld [vmem:[%s0 + $0x18] sm:$0xff]
  %v25 = vld [vmem:[%s0 + $0x20] sm:$0xff]
  %v26 = vld [vmem:[%s0 + $0x28] sm:$0xff]
  %v27 = vld [vmem:[%s0 + $0x30] sm:$0xff]
  %v28 = vld [vmem:[%s0 + $0x38] sm:$0xff]
  %v29 = vld [vmem:[%s0 + $0x40] sm:$0xff]
  %v30 = vld [vmem:[%s0 + $0x48] sm:$0xff]
  %v31 = vld [vmem:[%s0 + $0x50] sm:$0xff]
  %v32 = vld [vmem:[%s0 + $0x58] sm:$0xff]
  %v33 = vld [vmem:[%s0 + $0x60] sm:$0xff]
  %v34 = vld [vmem:[%s0 + $0x68] sm:$0xff]
  %v35 = vld [vmem:[%s0 + $0x70] sm:$0xff]
  %v36 = vld [vmem:[%s0 + $0x78] sm:$0xff]
  %v37 = vld [vmem:[%s0 + $0x80] sm:$0xff]
  %v38 = vld [vmem:[%s0 + $0x88] sm:$0xff]
  %v39 = vld [vmem:[%s0 + $0x90] sm:$0xff]
  %v40 = vld [vmem:[%s0 + $0x98] sm:$0xff]
  %v41 = vld [vmem:[%s0 + $0xa0] sm:$0xff]
  %v42 = vld [vmem:[%s0 + $0xa8] sm:$0xff]
  %v43 = vld [vmem:[%s0 + $0xb0] sm:$0xff]
  %v44 = vld [vmem:[%s0 + $0xb8] sm:$0xff]
  %v45 = vld [vmem:[%s0 + $0xc0] sm:$0xff]
  %v46 = vld [vmem:[%s0 + $0xc8] sm:$0xff]
  %v47 = vpack.c.bf16 %v22, %v21
  %v48 = vpack.c.bf16 %v24, %v23
  %v49 = vpack.c.bf16 %v26, %v25
  %v50 = vpack.c.bf16 %v28, %v27
  %v51 = vpack.c.bf16 %v30, %v29
  %v52 = vpack.c.bf16 %v32, %v31
  %v53 = vpack.c.bf16 %v34, %v33
  %v54 = vpack.c.bf16 %v36, %v35
  %v55 = vpack.c.bf16 %v38, %v37
  %v56 = vpack.c.bf16 %v40, %v39
  %v57 = vpack.c.bf16 %v42, %v41
  %v58 = vpack.c.bf16 %v44, %v43
  %v59 = vpack.c.bf16 %v46, %v45
  %v60 = vld [vmem:[%s1] sm:$0xf]
  %v61 = vld [vmem:[%s1 + $0x4] sm:$0xf]
  %v62 = vld [vmem:[%s1 + $0x8] sm:$0xf]
  %v63 = vld [vmem:[%s1 + $0xc] sm:$0xf]
  %v64 = vld [vmem:[%s2] sm:$0x1]
  %v66 = vlaneseq
  %v67 = vshrl.u32 %v66, 7
  %v68 = vsub.s32 0, %v67
  %v69 = vrot.slane %v64, %v68
  %v75 = vunpack.c.l.b16 %v60
  %v76 = vunpack.c.l.b16 %v61
  %v77 = vunpack.c.l.b16 %v62
  %v78 = vunpack.c.l.b16 %v63
  %v79 = vpack.c.b16 %v76, %v75
  %v80 = vpack.c.b16 %v78, %v77
  %vm83 = vcmask 261120
  %v85 = vsel %vm83, %v47, 0
  %v88 = vsel %vm83, %v48, 0
  %v91 = vsel %vm83, %v49, 0
  %v94 = vsel %vm83, %v50, 0
  %v97 = vsel %vm83, %v51, 0
  %v100 = vsel %vm83, %v52, 0
  %v103 = vsel %vm83, %v53, 0
  %v106 = vsel %vm83, %v54, 0
  %v109 = vsel %vm83, %v55, 0
  %v112 = vsel %vm83, %v56, 0
  %v115 = vsel %vm83, %v57, 0
  %v118 = vsel %vm83, %v58, 0
  %v121 = vsel %vm83, %v59, 0
  %123 = vmatprep.subr.bf16.mxu0 0
  %124 = vmatpush1.bf16.msra.mxu0 %v79
  %125 = vmatprep.subr.bf16.mxu0 0
  %126 = vmatpush1.bf16.msra.mxu0 %v80
  %127 = vmatprep.subr.bf16.mxu0 0
  %128 = vmatpush1.bf16.msra.mxu0 0
  %129 = vmatprep.subr.bf16.mxu0 0
  %130 = vmatpush1.bf16.msra.mxu0 0
  %131 = vmatprep.subr.bf16.mxu0 0
  %132 = vmatpush1.bf16.msra.mxu0 0
  %133 = vmatprep.subr.bf16.mxu0 0
  %134 = vmatpush1.bf16.msra.mxu0 0
  %135 = vmatprep.subr.bf16.mxu0 0
  %136 = vmatpush1.bf16.msra.mxu0 0
  %137 = vmatprep.subr.bf16.mxu0 0
  %138 = vmatpush1.bf16.msra.mxu0 0
  %139 = vmatprep.subr.bf16.mxu0 0
  %140 = vmatpush1.bf16.msra.mxu0 0
  %141 = vmatprep.subr.bf16.mxu0 0
  %142 = vmatpush1.bf16.msra.mxu0 0
  %143 = vmatprep.subr.bf16.mxu0 0
  %144 = vmatpush1.bf16.msra.mxu0 0
  %145 = vmatprep.subr.bf16.mxu0 0
  %146 = vmatpush1.bf16.msra.mxu0 0
  %147 = vmatprep.subr.bf16.mxu0 0
  %148 = vmatpush1.bf16.msra.mxu0 0
  %149 = vmatprep.subr.bf16.mxu0 0
  %150 = vmatpush1.bf16.msra.mxu0 0
  %151 = vmatprep.subr.bf16.mxu0 0
  %152 = vmatpush1.bf16.msra.mxu0 0
  %153 = vmatprep.subr.bf16.mxu0 0
  %154 = vmatpush1.bf16.msra.mxu0 0
  %155 = vmatprep.mubr.bf16.mxu0 0
  %156 = vmatmul.mubr.bf16.gmra.mrb[0].mxu0 %v85
  %v157 = vpop.f32.mrb[0].mxu0
  %v158 = vadd.f32 %v69, %v157
  %v159 = vpop.f32.mrb[0].mxu0
  %v160 = vpop.f32.mrb[0].mxu0
  %v161 = vadd.f32 %v69, %v160
  %v162 = vpop.f32.mrb[0].mxu0
  %163 = vmatprep.mubr.bf16.mxu0 0
  %164 = vmatmul.mubr.bf16.gmra.mrb[0].mxu0 %v88
  %v165 = vpop.f32.mrb[0].mxu0
  %v166 = vadd.f32 %v69, %v165
  %v167 = vpop.f32.mrb[0].mxu0
  %v168 = vpop.f32.mrb[0].mxu0
  %v169 = vadd.f32 %v69, %v168
  %v170 = vpop.f32.mrb[0].mxu0
  %171 = vmatprep.mubr.bf16.mxu0 0
  %172 = vmatmul.mubr.bf16.gmra.mrb[0].mxu0 %v91
  %v173 = vpop.f32.mrb[0].mxu0
  %v174 = vadd.f32 %v69, %v173
  %v175 = vpop.f32.mrb[0].mxu0
  %v176 = vpop.f32.mrb[0].mxu0
  %v177 = vadd.f32 %v69, %v176
  %v178 = vpop.f32.mrb[0].mxu0
  %179 = vmatprep.mubr.bf16.mxu0 0
  %180 = vmatmul.mubr.bf16.gmra.mrb[0].mxu0 %v94
  %v181 = vpop.f32.mrb[0].mxu0
  %v182 = vadd.f32 %v69, %v181
  %v183 = vpop.f32.mrb[0].mxu0
  %v184 = vpop.f32.mrb[0].mxu0
  %v185 = vadd.f32 %v69, %v184
  %v186 = vpop.f32.mrb[0].mxu0
  %187 = vmatprep.mubr.bf16.mxu0 0
  %188 = vmatmul.mubr.bf16.gmra.mrb[0].mxu0 %v97
  %v189 = vpop.f32.mrb[0].mxu0
  %v190 = vadd.f32 %v69, %v189
  %v191 = vpop.f32.mrb[0].mxu0
  %v192 = vpop.f32.mrb[0].mxu0
  %v193 = vadd.f32 %v69, %v192
  %v194 = vpop.f32.mrb[0].mxu0
  %195 = vmatprep.mubr.bf16.mxu0 0
  %196 = vmatmul.mubr.bf16.gmra.mrb[0].mxu0 %v100
  %v197 = vpop.f32.mrb[0].mxu0
  %v198 = vadd.f32 %v69, %v197
  %v199 = vpop.f32.mrb[0].mxu0
  %v200 = vpop.f32.mrb[0].mxu0
  %v201 = vadd.f32 %v69, %v200
  %v202 = vpop.f32.mrb[0].mxu0
  %203 = vmatprep.mubr.bf16.mxu0 0
  %204 = vmatmul.mubr.bf16.gmra.mrb[0].mxu0 %v103
  %v205 = vpop.f32.mrb[0].mxu0
  %v206 = vadd.f32 %v69, %v205
  %v207 = vpop.f32.mrb[0].mxu0
  %v208 = vpop.f32.mrb[0].mxu0
  %v209 = vadd.f32 %v69, %v208
  %v210 = vpop.f32.mrb[0].mxu0
  %211 = vmatprep.mubr.bf16.mxu0 0
  %212 = vmatmul.mubr.bf16.gmra.mrb[0].mxu0 %v106
  %v213 = vpop.f32.mrb[0].mxu0
  %v214 = vadd.f32 %v69, %v213
  %v215 = vpop.f32.mrb[0].mxu0
  %v216 = vpop.f32.mrb[0].mxu0
  %v217 = vadd.f32 %v69, %v216
  %v218 = vpop.f32.mrb[0].mxu0
  %219 = vmatprep.mubr.bf16.mxu0 0
  %220 = vmatmul.mubr.bf16.gmra.mrb[0].mxu0 %v109
  %v221 = vpop.f32.mrb[0].mxu0
  %v222 = vadd.f32 %v69, %v221
  %v223 = vpop.f32.mrb[0].mxu0
  %v224 = vpop.f32.mrb[0].mxu0
  %v225 = vadd.f32 %v69, %v224
  %v226 = vpop.f32.mrb[0].mxu0
  %227 = vmatprep.mubr.bf16.mxu0 0
  %228 = vmatmul.mubr.bf16.gmra.mrb[0].mxu0 %v112
  %v229 = vpop.f32.mrb[0].mxu0
  %v230 = vadd.f32 %v69, %v229
  %v231 = vpop.f32.mrb[0].mxu0
  %v232 = vpop.f32.mrb[0].mxu0
  %v233 = vadd.f32 %v69, %v232
  %v234 = vpop.f32.mrb[0].mxu0
  %235 = vmatprep.mubr.bf16.mxu0 0
  %236 = vmatmul.mubr.bf16.gmra.mrb[0].mxu0 %v115
  %v237 = vpop.f32.mrb[0].mxu0
  %v238 = vadd.f32 %v69, %v237
  %v239 = vpop.f32.mrb[0].mxu0
  %v240 = vpop.f32.mrb[0].mxu0
  %v241 = vadd.f32 %v69, %v240
  %v242 = vpop.f32.mrb[0].mxu0
  %243 = vmatprep.mubr.bf16.mxu0 0
  %244 = vmatmul.mubr.bf16.gmra.mrb[0].mxu0 %v118
  %v245 = vpop.f32.mrb[0].mxu0
  %v246 = vadd.f32 %v69, %v245
  %v247 = vpop.f32.mrb[0].mxu0
  %v248 = vpop.f32.mrb[0].mxu0
  %v249 = vadd.f32 %v69, %v248
  %v250 = vpop.f32.mrb[0].mxu0
  %251 = vmatprep.mubr.bf16.mxu0 0
  %252 = vmatmul.mubr.bf16.gmra.mrb[0].mxu0 %v121
  %v253 = vpop.f32.mrb[0].mxu0
  %v254 = vadd.f32 %v69, %v253
  %v255 = vpop.f32.mrb[0].mxu0
  %v256 = vpop.f32.mrb[0].mxu0
  %v257 = vadd.f32 %v69, %v256
  %v258 = vpop.f32.mrb[0].mxu0
  %259 = vdwg.mxu0
  %v260 = vmax.f32 %v158, 0.0
  %v261 = vmax.f32 %v161, 0.0
  %v262 = vmax.f32 %v166, 0.0
  %v263 = vmax.f32 %v169, 0.0
  %v264 = vmax.f32 %v174, 0.0
  %v265 = vmax.f32 %v177, 0.0
  %v266 = vmax.f32 %v182, 0.0
  %v267 = vmax.f32 %v185, 0.0
  %v268 = vmax.f32 %v190, 0.0
  %v269 = vmax.f32 %v193, 0.0
  %v270 = vmax.f32 %v198, 0.0
  %v271 = vmax.f32 %v201, 0.0
  %v272 = vmax.f32 %v206, 0.0
  %v273 = vmax.f32 %v209, 0.0
  %v274 = vmax.f32 %v214, 0.0
  %v275 = vmax.f32 %v217, 0.0
  %v276 = vmax.f32 %v222, 0.0
  %v277 = vmax.f32 %v225, 0.0
  %v278 = vmax.f32 %v230, 0.0
  %v279 = vmax.f32 %v233, 0.0
  %v280 = vmax.f32 %v238, 0.0
  %v281 = vmax.f32 %v241, 0.0
  %v282 = vmax.f32 %v246, 0.0
  %v283 = vmax.f32 %v249, 0.0
  %v284 = vmax.f32 %v254, 0.0
  %v285 = vmax.f32 %v257, 0.0
  %v286 = vpack.c.bf16 %v261, %v260
  %v287 = vpack.c.bf16 %v263, %v262
  %v288 = vpack.c.bf16 %v265, %v264
  %v289 = vpack.c.bf16 %v267, %v266
  %v290 = vpack.c.bf16 %v269, %v268
  %v291 = vpack.c.bf16 %v271, %v270
  %v292 = vpack.c.bf16 %v273, %v272
  %v293 = vpack.c.bf16 %v275, %v274
  %v294 = vpack.c.bf16 %v277, %v276
  %v295 = vpack.c.bf16 %v279, %v278
  %v296 = vpack.c.bf16 %v281, %v280
  %v297 = vpack.c.bf16 %v283, %v282
  %v298 = vpack.c.bf16 %v285, %v284
  %v299 = vld [vmem:[%s3] sm:$0xf]
  %v300 = vld [vmem:[%s3 + $0x4] sm:$0xf]
  %v301 = vld [vmem:[%s4] sm:$0x1]
  %v303 = vlaneseq
  %v304 = vshrl.u32 %v303, 7
  %v305 = vsub.s32 0, %v304
  %v306 = vrot.slane %v301, %v305
  %v310 = vunpack.c.l.b16 %v299
  %v311 = vunpack.c.l.b16 %v300
  %v312 = vpack.c.b16 %v311, %v310
  %vm314 = vcmask 130048
  %v316 = vsel %vm314, %v286, 0
  %v319 = vsel %vm314, %v287, 0
  %v322 = vsel %vm314, %v288, 0
  %v325 = vsel %vm314, %v289, 0
  %v328 = vsel %vm314, %v290, 0
  %v331 = vsel %vm314, %v291, 0
  %v334 = vsel %vm314, %v292, 0
  %v337 = vsel %vm314, %v293, 0
  %v340 = vsel %vm314, %v294, 0
  %v343 = vsel %vm314, %v295, 0
  %v346 = vsel %vm314, %v296, 0
  %v349 = vsel %vm314, %v297, 0
  %v352 = vsel %vm314, %v298, 0
  %354 = vmatprep.subr.bf16.mxu0 0
  %355 = vmatpush1.bf16.msra.mxu0 %v312
  %356 = vmatprep.subr.bf16.mxu0 0
  %357 = vmatpush1.bf16.msra.mxu0 0
  %358 = vmatprep.subr.bf16.mxu0 0
  %359 = vmatpush1.bf16.msra.mxu0 0
  %360 = vmatprep.subr.bf16.mxu0 0
  %361 = vmatpush1.bf16.msra.mxu0 0
  %362 = vmatprep.subr.bf16.mxu0 0
  %363 = vmatpush1.bf16.msra.mxu0 0
  %364 = vmatprep.subr.bf16.mxu0 0
  %365 = vmatpush1.bf16.msra.mxu0 0
  %366 = vmatprep.subr.bf16.mxu0 0
  %367 = vmatpush1.bf16.msra.mxu0 0
  %368 = vmatprep.subr.bf16.mxu0 0
  %369 = vmatpush1.bf16.msra.mxu0 0
  %370 = vmatprep.subr.bf16.mxu0 0
  %371 = vmatpush1.bf16.msra.mxu0 0
  %372 = vmatprep.subr.bf16.mxu0 0
  %373 = vmatpush1.bf16.msra.mxu0 0
  %374 = vmatprep.subr.bf16.mxu0 0
  %375 = vmatpush1.bf16.msra.mxu0 0
  %376 = vmatprep.subr.bf16.mxu0 0
  %377 = vmatpush1.bf16.msra.mxu0 0
  %378 = vmatprep.subr.bf16.mxu0 0
  %379 = vmatpush1.bf16.msra.mxu0 0
  %380 = vmatprep.subr.bf16.mxu0 0
  %381 = vmatpush1.bf16.msra.mxu0 0
  %382 = vmatprep.subr.bf16.mxu0 0
  %383 = vmatpush1.bf16.msra.mxu0 0
  %384 = vmatprep.subr.bf16.mxu0 0
  %385 = vmatpush1.bf16.msra.mxu0 0
  %386 = vmatprep.mubr.bf16.mxu0 0
  %387 = vmatmul.mubr.bf16.gmra.mrb[0].mxu0 %v316
  %v388 = vpop.f32.mrb[0].mxu0
  %v389 = vadd.f32 %v306, %v388
  %v390 = vpop.f32.mrb[0].mxu0
  %v391 = vpop.f32.mrb[0].mxu0
  %v392 = vadd.f32 %v306, %v391
  %v393 = vpop.f32.mrb[0].mxu0
  %394 = vmatprep.mubr.bf16.mxu0 0
  %395 = vmatmul.mubr.bf16.gmra.mrb[0].mxu0 %v319
  %v396 = vpop.f32.mrb[0].mxu0
  %v397 = vadd.f32 %v306, %v396
  %v398 = vpop.f32.mrb[0].mxu0
  %v399 = vpop.f32.mrb[0].mxu0
  %v400 = vadd.f32 %v306, %v399
  %v401 = vpop.f32.mrb[0].mxu0
  %402 = vmatprep.mubr.bf16.mxu0 0
  %403 = vmatmul.mubr.bf16.gmra.mrb[0].mxu0 %v322
  %v404 = vpop.f32.mrb[0].mxu0
  %v405 = vadd.f32 %v306, %v404
  %v406 = vpop.f32.mrb[0].mxu0
  %v407 = vpop.f32.mrb[0].mxu0
  %v408 = vadd.f32 %v306, %v407
  %v409 = vpop.f32.mrb[0].mxu0
  %410 = vmatprep.mubr.bf16.mxu0 0
  %411 = vmatmul.mubr.bf16.gmra.mrb[0].mxu0 %v325
  %v412 = vpop.f32.mrb[0].mxu0
  %v413 = vadd.f32 %v306, %v412
  %v414 = vpop.f32.mrb[0].mxu0
  %v415 = vpop.f32.mrb[0].mxu0
  %v416 = vadd.f32 %v306, %v415
  %v417 = vpop.f32.mrb[0].mxu0
  %418 = vmatprep.mubr.bf16.mxu0 0
  %419 = vmatmul.mubr.bf16.gmra.mrb[0].mxu0 %v328
  %v420 = vpop.f32.mrb[0].mxu0
  %v421 = vadd.f32 %v306, %v420
  %v422 = vpop.f32.mrb[0].mxu0
  %v423 = vpop.f32.mrb[0].mxu0
  %v424 = vadd.f32 %v306, %v423
  %v425 = vpop.f32.mrb[0].mxu0
  %426 = vmatprep.mubr.bf16.mxu0 0
  %427 = vmatmul.mubr.bf16.gmra.mrb[0].mxu0 %v331
  %v428 = vpop.f32.mrb[0].mxu0
  %v429 = vadd.f32 %v306, %v428
  %v430 = vpop.f32.mrb[0].mxu0
  %v431 = vpop.f32.mrb[0].mxu0
  %v432 = vadd.f32 %v306, %v431
  %v433 = vpop.f32.mrb[0].mxu0
  %434 = vmatprep.mubr.bf16.mxu0 0
  %435 = vmatmul.mubr.bf16.gmra.mrb[0].mxu0 %v334
  %v436 = vpop.f32.mrb[0].mxu0
  %v437 = vadd.f32 %v306, %v436
  %v438 = vpop.f32.mrb[0].mxu0
  %v439 = vpop.f32.mrb[0].mxu0
  %v440 = vadd.f32 %v306, %v439
  %v441 = vpop.f32.mrb[0].mxu0
  %442 = vmatprep.mubr.bf16.mxu0 0
  %443 = vmatmul.mubr.bf16.gmra.mrb[0].mxu0 %v337
  %v444 = vpop.f32.mrb[0].mxu0
  %v445 = vadd.f32 %v306, %v444
  %v446 = vpop.f32.mrb[0].mxu0
  %v447 = vpop.f32.mrb[0].mxu0
  %v448 = vadd.f32 %v306, %v447
  %v449 = vpop.f32.mrb[0].mxu0
  %450 = vmatprep.mubr.bf16.mxu0 0
  %451 = vmatmul.mubr.bf16.gmra.mrb[0].mxu0 %v340
  %v452 = vpop.f32.mrb[0].mxu0
  %v453 = vadd.f32 %v306, %v452
  %v454 = vpop.f32.mrb[0].mxu0
  %v455 = vpop.f32.mrb[0].mxu0
  %v456 = vadd.f32 %v306, %v455
  %v457 = vpop.f32.mrb[0].mxu0
  %458 = vmatprep.mubr.bf16.mxu0 0
  %459 = vmatmul.mubr.bf16.gmra.mrb[0].mxu0 %v343
  %v460 = vpop.f32.mrb[0].mxu0
  %v461 = vadd.f32 %v306, %v460
  %v462 = vpop.f32.mrb[0].mxu0
  %v463 = vpop.f32.mrb[0].mxu0
  %v464 = vadd.f32 %v306, %v463
  %v465 = vpop.f32.mrb[0].mxu0
  %466 = vmatprep.mubr.bf16.mxu0 0
  %467 = vmatmul.mubr.bf16.gmra.mrb[0].mxu0 %v346
  %v468 = vpop.f32.mrb[0].mxu0
  %v469 = vadd.f32 %v306, %v468
  %v470 = vpop.f32.mrb[0].mxu0
  %v471 = vpop.f32.mrb[0].mxu0
  %v472 = vadd.f32 %v306, %v471
  %v473 = vpop.f32.mrb[0].mxu0
  %474 = vmatprep.mubr.bf16.mxu0 0
  %475 = vmatmul.mubr.bf16.gmra.mrb[0].mxu0 %v349
  %v476 = vpop.f32.mrb[0].mxu0
  %v477 = vadd.f32 %v306, %v476
  %v478 = vpop.f32.mrb[0].mxu0
  %v479 = vpop.f32.mrb[0].mxu0
  %v480 = vadd.f32 %v306, %v479
  %v481 = vpop.f32.mrb[0].mxu0
  %482 = vmatprep.mubr.bf16.mxu0 0
  %483 = vmatmul.mubr.bf16.gmra.mrb[0].mxu0 %v352
  %v484 = vpop.f32.mrb[0].mxu0
  %v485 = vadd.f32 %v306, %v484
  %v486 = vpop.f32.mrb[0].mxu0
  %v487 = vpop.f32.mrb[0].mxu0
  %v488 = vadd.f32 %v306, %v487
  %v489 = vpop.f32.mrb[0].mxu0
  %490 = vdwg.mxu0
  %vm491 = vcmask 31744
  %v492 = vsel %vm491, %v389, -inf
  %493 = vmax.xlane.f32.xlu0 %v492
  %v494 = vpop.xlane.xlu0 %493
  %v495 = vsel %vm491, %v392, -inf
  %496 = vmax.xlane.f32.xlu0 %v495
  %v497 = vpop.xlane.xlu0 %496
  %v498 = vsel %vm491, %v397, -inf
  %499 = vmax.xlane.f32.xlu0 %v498
  %v500 = vpop.xlane.xlu0 %499
  %v501 = vsel %vm491, %v400, -inf
  %502 = vmax.xlane.f32.xlu0 %v501
  %v503 = vpop.xlane.xlu0 %502
  %v504 = vsel %vm491, %v405, -inf
  %505 = vmax.xlane.f32.xlu0 %v504
  %v506 = vpop.xlane.xlu0 %505
  %v507 = vsel %vm491, %v408, -inf
  %508 = vmax.xlane.f32.xlu0 %v507
  %v509 = vpop.xlane.xlu0 %508
  %v510 = vsel %vm491, %v413, -inf
  %511 = vmax.xlane.f32.xlu0 %v510
  %v512 = vpop.xlane.xlu0 %511
  %v513 = vsel %vm491, %v416, -inf
  %514 = vmax.xlane.f32.xlu0 %v513
  %v515 = vpop.xlane.xlu0 %514
  %v516 = vsel %vm491, %v421, -inf
  %517 = vmax.xlane.f32.xlu0 %v516
  %v518 = vpop.xlane.xlu0 %517
  %v519 = vsel %vm491, %v424, -inf
  %520 = vmax.xlane.f32.xlu0 %v519
  %v521 = vpop.xlane.xlu0 %520
  %v522 = vsel %vm491, %v429, -inf
  %523 = vmax.xlane.f32.xlu0 %v522
  %v524 = vpop.xlane.xlu0 %523
  %v525 = vsel %vm491, %v432, -inf
  %526 = vmax.xlane.f32.xlu0 %v525
  %v527 = vpop.xlane.xlu0 %526
  %v528 = vsel %vm491, %v437, -inf
  %529 = vmax.xlane.f32.xlu0 %v528
  %v530 = vpop.xlane.xlu0 %529
  %v531 = vsel %vm491, %v440, -inf
  %532 = vmax.xlane.f32.xlu0 %v531
  %v533 = vpop.xlane.xlu0 %532
  %v534 = vsel %vm491, %v445, -inf
  %535 = vmax.xlane.f32.xlu0 %v534
  %v536 = vpop.xlane.xlu0 %535
  %v537 = vsel %vm491, %v448, -inf
  %538 = vmax.xlane.f32.xlu0 %v537
  %v539 = vpop.xlane.xlu0 %538
  %v540 = vsel %vm491, %v453, -inf
  %541 = vmax.xlane.f32.xlu0 %v540
  %v542 = vpop.xlane.xlu0 %541
  %v543 = vsel %vm491, %v456, -inf
  %544 = vmax.xlane.f32.xlu0 %v543
  %v545 = vpop.xlane.xlu0 %544
  %v546 = vsel %vm491, %v461, -inf
  %547 = vmax.xlane.f32.xlu0 %v546
  %v548 = vpop.xlane.xlu0 %547
  %v549 = vsel %vm491, %v464, -inf
  %550 = vmax.xlane.f32.xlu0 %v549
  %v551 = vpop.xlane.xlu0 %550
  %v552 = vsel %vm491, %v469, -inf
  %553 = vmax.xlane.f32.xlu0 %v552
  %v554 = vpop.xlane.xlu0 %553
  %v555 = vsel %vm491, %v472, -inf
  %556 = vmax.xlane.f32.xlu0 %v555
  %v557 = vpop.xlane.xlu0 %556
  %v558 = vsel %vm491, %v477, -inf
  %559 = vmax.xlane.f32.xlu0 %v558
  %v560 = vpop.xlane.xlu0 %559
  %v561 = vsel %vm491, %v480, -inf
  %562 = vmax.xlane.f32.xlu0 %v561
  %v563 = vpop.xlane.xlu0 %562
  %v564 = vsel %vm491, %v485, -inf
  %565 = vmax.xlane.f32.xlu0 %v564
  %v566 = vpop.xlane.xlu0 %565
  %v567 = vsel %vm491, %v488, -inf
  %568 = vmax.xlane.f32.xlu0 %v567
  %v569 = vpop.xlane.xlu0 %568
  %v570 = vsub.f32 %v389, %v494
  %v571 = vsub.f32 %v392, %v497
  %v572 = vsub.f32 %v397, %v500
  %v573 = vsub.f32 %v400, %v503
  %v574 = vsub.f32 %v405, %v506
  %v575 = vsub.f32 %v408, %v509
  %v576 = vsub.f32 %v413, %v512
  %v577 = vsub.f32 %v416, %v515
  %v578 = vsub.f32 %v421, %v518
  %v579 = vsub.f32 %v424, %v521
  %v580 = vsub.f32 %v429, %v524
  %v581 = vsub.f32 %v432, %v527
  %v582 = vsub.f32 %v437, %v530
  %v583 = vsub.f32 %v440, %v533
  %v584 = vsub.f32 %v445, %v536
  %v585 = vsub.f32 %v448, %v539
  %v586 = vsub.f32 %v453, %v542
  %v587 = vsub.f32 %v456, %v545
  %v588 = vsub.f32 %v461, %v548
  %v589 = vsub.f32 %v464, %v551
  %v590 = vsub.f32 %v469, %v554
  %v591 = vsub.f32 %v472, %v557
  %v592 = vsub.f32 %v477, %v560
  %v593 = vsub.f32 %v480, %v563
  %v594 = vsub.f32 %v485, %v566
  %v595 = vsub.f32 %v488, %v569
  %v596 = vmul.f32 %v570, 1.442695
  %v597 = vpow.pop %v596
  %v598 = vmul.f32 %v571, 1.442695
  %v599 = vpow.pop %v598
  %v600 = vmul.f32 %v572, 1.442695
  %v601 = vpow.pop %v600
  %v602 = vmul.f32 %v573, 1.442695
  %v603 = vpow.pop %v602
  %v604 = vmul.f32 %v574, 1.442695
  %v605 = vpow.pop %v604
  %v606 = vmul.f32 %v575, 1.442695
  %v607 = vpow.pop %v606
  %v608 = vmul.f32 %v576, 1.442695
  %v609 = vpow.pop %v608
  %v610 = vmul.f32 %v577, 1.442695
  %v611 = vpow.pop %v610
  %v612 = vmul.f32 %v578, 1.442695
  %v613 = vpow.pop %v612
  %v614 = vmul.f32 %v579, 1.442695
  %v615 = vpow.pop %v614
  %v616 = vmul.f32 %v580, 1.442695
  %v617 = vpow.pop %v616
  %v618 = vmul.f32 %v581, 1.442695
  %v619 = vpow.pop %v618
  %v620 = vmul.f32 %v582, 1.442695
  %v621 = vpow.pop %v620
  %v622 = vmul.f32 %v583, 1.442695
  %v623 = vpow.pop %v622
  %v624 = vmul.f32 %v584, 1.442695
  %v625 = vpow.pop %v624
  %v626 = vmul.f32 %v585, 1.442695
  %v627 = vpow.pop %v626
  %v628 = vmul.f32 %v586, 1.442695
  %v629 = vpow.pop %v628
  %v630 = vmul.f32 %v587, 1.442695
  %v631 = vpow.pop %v630
  %v632 = vmul.f32 %v588, 1.442695
  %v633 = vpow.pop %v632
  %v634 = vmul.f32 %v589, 1.442695
  %v635 = vpow.pop %v634
  %v636 = vmul.f32 %v590, 1.442695
  %v637 = vpow.pop %v636
  %v638 = vmul.f32 %v591, 1.442695
  %v639 = vpow.pop %v638
  %v640 = vmul.f32 %v592, 1.442695
  %v641 = vpow.pop %v640
  %v642 = vmul.f32 %v593, 1.442695
  %v643 = vpow.pop %v642
  %v644 = vmul.f32 %v594, 1.442695
  %v645 = vpow.pop %v644
  %v646 = vmul.f32 %v595, 1.442695
  %v647 = vpow.pop %v646
  %v648 = vsel %vm491, %v597, 0.0
  %649 = vadd.xlane.f32.xlu0 %v648
  %v650 = vpop.xlane.xlu0 %649
  %v651 = vsel %vm491, %v599, 0.0
  %652 = vadd.xlane.f32.xlu0 %v651
  %v653 = vpop.xlane.xlu0 %652
  %v654 = vsel %vm491, %v601, 0.0
  %655 = vadd.xlane.f32.xlu0 %v654
  %v656 = vpop.xlane.xlu0 %655
  %v657 = vsel %vm491, %v603, 0.0
  %658 = vadd.xlane.f32.xlu0 %v657
  %v659 = vpop.xlane.xlu0 %658
  %v660 = vsel %vm491, %v605, 0.0
  %661 = vadd.xlane.f32.xlu0 %v660
  %v662 = vpop.xlane.xlu0 %661
  %v663 = vsel %vm491, %v607, 0.0
  %664 = vadd.xlane.f32.xlu0 %v663
  %v665 = vpop.xlane.xlu0 %664
  %v666 = vsel %vm491, %v609, 0.0
  %667 = vadd.xlane.f32.xlu0 %v666
  %v668 = vpop.xlane.xlu0 %667
  %v669 = vsel %vm491, %v611, 0.0
  %670 = vadd.xlane.f32.xlu0 %v669
  %v671 = vpop.xlane.xlu0 %670
  %v672 = vsel %vm491, %v613, 0.0
  %673 = vadd.xlane.f32.xlu0 %v672
  %v674 = vpop.xlane.xlu0 %673
  %v675 = vsel %vm491, %v615, 0.0
  %676 = vadd.xlane.f32.xlu0 %v675
  %v677 = vpop.xlane.xlu0 %676
  %v678 = vsel %vm491, %v617, 0.0
  %679 = vadd.xlane.f32.xlu0 %v678
  %v680 = vpop.xlane.xlu0 %679
  %v681 = vsel %vm491, %v619, 0.0
  %682 = vadd.xlane.f32.xlu0 %v681
  %v683 = vpop.xlane.xlu0 %682
  %v684 = vsel %vm491, %v621, 0.0
  %685 = vadd.xlane.f32.xlu0 %v684
  %v686 = vpop.xlane.xlu0 %685
  %v687 = vsel %vm491, %v623, 0.0
  %688 = vadd.xlane.f32.xlu0 %v687
  %v689 = vpop.xlane.xlu0 %688
  %v690 = vsel %vm491, %v625, 0.0
  %691 = vadd.xlane.f32.xlu0 %v690
  %v692 = vpop.xlane.xlu0 %691
  %v693 = vsel %vm491, %v627, 0.0
  %694 = vadd.xlane.f32.xlu0 %v693
  %v695 = vpop.xlane.xlu0 %694
  %v696 = vsel %vm491, %v629, 0.0
  %697 = vadd.xlane.f32.xlu0 %v696
  %v698 = vpop.xlane.xlu0 %697
  %v699 = vsel %vm491, %v631, 0.0
  %700 = vadd.xlane.f32.xlu0 %v699
  %v701 = vpop.xlane.xlu0 %700
  %v702 = vsel %vm491, %v633, 0.0
  %703 = vadd.xlane.f32.xlu0 %v702
  %v704 = vpop.xlane.xlu0 %703
  %v705 = vsel %vm491, %v635, 0.0
  %706 = vadd.xlane.f32.xlu0 %v705
  %v707 = vpop.xlane.xlu0 %706
  %v708 = vsel %vm491, %v637, 0.0
  %709 = vadd.xlane.f32.xlu0 %v708
  %v710 = vpop.xlane.xlu0 %709
  %v711 = vsel %vm491, %v639, 0.0
  %712 = vadd.xlane.f32.xlu0 %v711
  %v713 = vpop.xlane.xlu0 %712
  %v714 = vsel %vm491, %v641, 0.0
  %715 = vadd.xlane.f32.xlu0 %v714
  %v716 = vpop.xlane.xlu0 %715
  %v717 = vsel %vm491, %v643, 0.0
  %718 = vadd.xlane.f32.xlu0 %v717
  %v719 = vpop.xlane.xlu0 %718
  %v720 = vsel %vm491, %v645, 0.0
  %721 = vadd.xlane.f32.xlu0 %v720
  %v722 = vpop.xlane.xlu0 %721
  %v723 = vsel %vm491, %v647, 0.0
  %724 = vadd.xlane.f32.xlu0 %v723
  %v725 = vpop.xlane.xlu0 %724
  %v726 = vlog2.pop %v650
  %v727 = vmul.f32 %v726, 0.6931472
  %v728 = vlog2.pop %v653
  %v729 = vmul.f32 %v728, 0.6931472
  %v730 = vlog2.pop %v656
  %v731 = vmul.f32 %v730, 0.6931472
  %v732 = vlog2.pop %v659
  %v733 = vmul.f32 %v732, 0.6931472
  %v734 = vlog2.pop %v662
  %v735 = vmul.f32 %v734, 0.6931472
  %v736 = vlog2.pop %v665
  %v737 = vmul.f32 %v736, 0.6931472
  %v738 = vlog2.pop %v668
  %v739 = vmul.f32 %v738, 0.6931472
  %v740 = vlog2.pop %v671
  %v741 = vmul.f32 %v740, 0.6931472
  %v742 = vlog2.pop %v674
  %v743 = vmul.f32 %v742, 0.6931472
  %v744 = vlog2.pop %v677
  %v745 = vmul.f32 %v744, 0.6931472
  %v746 = vlog2.pop %v680
  %v747 = vmul.f32 %v746, 0.6931472
  %v748 = vlog2.pop %v683
  %v749 = vmul.f32 %v748, 0.6931472
  %v750 = vlog2.pop %v686
  %v751 = vmul.f32 %v750, 0.6931472
  %v752 = vlog2.pop %v689
  %v753 = vmul.f32 %v752, 0.6931472
  %v754 = vlog2.pop %v692
  %v755 = vmul.f32 %v754, 0.6931472
  %v756 = vlog2.pop %v695
  %v757 = vmul.f32 %v756, 0.6931472
  %v758 = vlog2.pop %v698
  %v759 = vmul.f32 %v758, 0.6931472
  %v760 = vlog2.pop %v701
  %v761 = vmul.f32 %v760, 0.6931472
  %v762 = vlog2.pop %v704
  %v763 = vmul.f32 %v762, 0.6931472
  %v764 = vlog2.pop %v707
  %v765 = vmul.f32 %v764, 0.6931472
  %v766 = vlog2.pop %v710
  %v767 = vmul.f32 %v766, 0.6931472
  %v768 = vlog2.pop %v713
  %v769 = vmul.f32 %v768, 0.6931472
  %v770 = vlog2.pop %v716
  %v771 = vmul.f32 %v770, 0.6931472
  %v772 = vlog2.pop %v719
  %v773 = vmul.f32 %v772, 0.6931472
  %v774 = vlog2.pop %v722
  %v775 = vmul.f32 %v774, 0.6931472
  %v776 = vlog2.pop %v725
  %v777 = vmul.f32 %v776, 0.6931472
  %v778 = vsub.f32 %v570, %v727
  %v779 = vsub.f32 %v571, %v729
  %v780 = vsub.f32 %v572, %v731
  %v781 = vsub.f32 %v573, %v733
  %v782 = vsub.f32 %v574, %v735
  %v783 = vsub.f32 %v575, %v737
  %v784 = vsub.f32 %v576, %v739
  %v785 = vsub.f32 %v577, %v741
  %v786 = vsub.f32 %v578, %v743
  %v787 = vsub.f32 %v579, %v745
  %v788 = vsub.f32 %v580, %v747
  %v789 = vsub.f32 %v581, %v749
  %v790 = vsub.f32 %v582, %v751
  %v791 = vsub.f32 %v583, %v753
  %v792 = vsub.f32 %v584, %v755
  %v793 = vsub.f32 %v585, %v757
  %v794 = vsub.f32 %v586, %v759
  %v795 = vsub.f32 %v587, %v761
  %v796 = vsub.f32 %v588, %v763
  %v797 = vsub.f32 %v589, %v765
  %v798 = vsub.f32 %v590, %v767
  %v799 = vsub.f32 %v591, %v769
  %v800 = vsub.f32 %v592, %v771
  %v801 = vsub.f32 %v593, %v773
  %v802 = vsub.f32 %v594, %v775
  %v803 = vsub.f32 %v595, %v777
  %830 = vrot.lane.b32.xlu0 %v389, 4
  %v831 = vpop.permute.xlu0 %830
  %832 = vrot.lane.b32.xlu0 %v392, 4
  %v833 = vpop.permute.xlu0 %832
  %834 = vrot.lane.b32.xlu0 %v397, 4
  %v835 = vpop.permute.xlu0 %834
  %836 = vrot.lane.b32.xlu0 %v400, 4
  %v837 = vpop.permute.xlu0 %836
  %838 = vrot.lane.b32.xlu0 %v405, 4
  %v839 = vpop.permute.xlu0 %838
  %840 = vrot.lane.b32.xlu0 %v408, 4
  %v841 = vpop.permute.xlu0 %840
  %842 = vrot.lane.b32.xlu0 %v413, 4
  %v843 = vpop.permute.xlu0 %842
  %844 = vrot.lane.b32.xlu0 %v416, 4
  %v845 = vpop.permute.xlu0 %844
  %846 = vrot.lane.b32.xlu0 %v421, 4
  %v847 = vpop.permute.xlu0 %846
  %848 = vrot.lane.b32.xlu0 %v424, 4
  %v849 = vpop.permute.xlu0 %848
  %850 = vrot.lane.b32.xlu0 %v429, 4
  %v851 = vpop.permute.xlu0 %850
  %852 = vrot.lane.b32.xlu0 %v432, 4
  %v853 = vpop.permute.xlu0 %852
  %854 = vrot.lane.b32.xlu0 %v437, 4
  %v855 = vpop.permute.xlu0 %854
  %856 = vrot.lane.b32.xlu0 %v440, 4
  %v857 = vpop.permute.xlu0 %856
  %858 = vrot.lane.b32.xlu0 %v445, 4
  %v859 = vpop.permute.xlu0 %858
  %860 = vrot.lane.b32.xlu0 %v448, 4
  %v861 = vpop.permute.xlu0 %860
  %862 = vrot.lane.b32.xlu0 %v453, 4
  %v863 = vpop.permute.xlu0 %862
  %864 = vrot.lane.b32.xlu0 %v456, 4
  %v865 = vpop.permute.xlu0 %864
  %866 = vrot.lane.b32.xlu0 %v461, 4
  %v867 = vpop.permute.xlu0 %866
  %868 = vrot.lane.b32.xlu0 %v464, 4
  %v869 = vpop.permute.xlu0 %868
  %870 = vrot.lane.b32.xlu0 %v469, 4
  %v871 = vpop.permute.xlu0 %870
  %872 = vrot.lane.b32.xlu0 %v472, 4
  %v873 = vpop.permute.xlu0 %872
  %874 = vrot.lane.b32.xlu0 %v477, 4
  %v875 = vpop.permute.xlu0 %874
  %876 = vrot.lane.b32.xlu0 %v480, 4
  %v877 = vpop.permute.xlu0 %876
  %878 = vrot.lane.b32.xlu0 %v485, 4
  %v879 = vpop.permute.xlu0 %878
  %880 = vrot.lane.b32.xlu0 %v488, 4
  %v881 = vpop.permute.xlu0 %880
  %v908 = vsel %vm491, %v778, %v831
  %v909 = vsel %vm491, %v779, %v833
  %v910 = vsel %vm491, %v780, %v835
  %v911 = vsel %vm491, %v781, %v837
  %v912 = vsel %vm491, %v782, %v839
  %v913 = vsel %vm491, %v783, %v841
  %v914 = vsel %vm491, %v784, %v843
  %v915 = vsel %vm491, %v785, %v845
  %v916 = vsel %vm491, %v786, %v847
  %v917 = vsel %vm491, %v787, %v849
  %v918 = vsel %vm491, %v788, %v851
  %v919 = vsel %vm491, %v789, %v853
  %v920 = vsel %vm491, %v790, %v855
  %v921 = vsel %vm491, %v791, %v857
  %v922 = vsel %vm491, %v792, %v859
  %v923 = vsel %vm491, %v793, %v861
  %v924 = vsel %vm491, %v794, %v863
  %v925 = vsel %vm491, %v795, %v865
  %v926 = vsel %vm491, %v796, %v867
  %v927 = vsel %vm491, %v797, %v869
  %v928 = vsel %vm491, %v798, %v871
  %v929 = vsel %vm491, %v799, %v873
  %v930 = vsel %vm491, %v800, %v875
  %v931 = vsel %vm491, %v801, %v877
  %v932 = vsel %vm491, %v802, %v879
  %v933 = vsel %vm491, %v803, %v881
  %vm934 = vcmask 64512
  %935 = vst.msk [vmem:[%s5] sm:$0xff] %vm934, %v908
  %936 = vst.msk [vmem:[%s5 + $0x8] sm:$0xff] %vm934, %v909
  %937 = vst.msk [vmem:[%s5 + $0x10] sm:$0xff] %vm934, %v910
  %938 = vst.msk [vmem:[%s5 + $0x18] sm:$0xff] %vm934, %v911
  %939 = vst.msk [vmem:[%s5 + $0x20] sm:$0xff] %vm934, %v912
  %940 = vst.msk [vmem:[%s5 + $0x28] sm:$0xff] %vm934, %v913
  %941 = vst.msk [vmem:[%s5 + $0x30] sm:$0xff] %vm934, %v914
  %942 = vst.msk [vmem:[%s5 + $0x38] sm:$0xff] %vm934, %v915
  %943 = vst.msk [vmem:[%s5 + $0x40] sm:$0xff] %vm934, %v916
  %944 = vst.msk [vmem:[%s5 + $0x48] sm:$0xff] %vm934, %v917
  %945 = vst.msk [vmem:[%s5 + $0x50] sm:$0xff] %vm934, %v918
  %946 = vst.msk [vmem:[%s5 + $0x58] sm:$0xff] %vm934, %v919
  %947 = vst.msk [vmem:[%s5 + $0x60] sm:$0xff] %vm934, %v920
  %948 = vst.msk [vmem:[%s5 + $0x68] sm:$0xff] %vm934, %v921
  %949 = vst.msk [vmem:[%s5 + $0x70] sm:$0xff] %vm934, %v922
  %950 = vst.msk [vmem:[%s5 + $0x78] sm:$0xff] %vm934, %v923
  %951 = vst.msk [vmem:[%s5 + $0x80] sm:$0xff] %vm934, %v924
  %952 = vst.msk [vmem:[%s5 + $0x88] sm:$0xff] %vm934, %v925
  %953 = vst.msk [vmem:[%s5 + $0x90] sm:$0xff] %vm934, %v926
  %954 = vst.msk [vmem:[%s5 + $0x98] sm:$0xff] %vm934, %v927
  %955 = vst.msk [vmem:[%s5 + $0xa0] sm:$0xff] %vm934, %v928
  %956 = vst.msk [vmem:[%s5 + $0xa8] sm:$0xff] %vm934, %v929
  %957 = vst.msk [vmem:[%s5 + $0xb0] sm:$0xff] %vm934, %v930
  %958 = vst.msk [vmem:[%s5 + $0xb8] sm:$0xff] %vm934, %v931
  %959 = vst.msk [vmem:[%s5 + $0xc0] sm:$0xff] %vm934, %v932
  %960 = vst.msk [vmem:[%s5 + $0xc8] sm:$0xff] %vm934, %v933
  // Predicated region
  $region22: #{tpu_custom_call.1} parent=0 // pred_check
    _
  $region23: #{tpu_custom_call.1} parent=0 // pred_check_branch
    %962 = sbr.rel (0) target = $region25
  $region24: #{tpu_custom_call.1} parent=0 // pred_region
    _
  $region25: #{tpu_custom_call.1} parent=0 // pred_fallthru
    _
  // Predicated region
  $region26: #{tpu_custom_call.1} parent=0 // pred_check
    _
  $region27: #{tpu_custom_call.1} parent=0 // pred_check_branch
    %964 = sbr.rel (0) target = $region29
  $region28: #{tpu_custom_call.1} parent=0 // pred_region
    _
  $region29: #{tpu_custom_call.1} parent=0 // pred_fallthru
    _

</llo_original>
